<compile_context>
chip_gen: v7x
topology: tpu7x:2x2x1
jax: 0.10.0
libtpu: 0.0.40
codegen_flags: <defaults>
</compile_context>

<pallas_src>
import math

import jax
import jax.numpy as jnp
from jax.experimental import pallas as pl
from jax.experimental.pallas import tpu as pltpu


def _round_up(v, m):
    return -(-v // m) * m


# ---------------------------------------------------------------------------
# Fused kernel: Linear -> ReLU -> (Dropout: identity) -> Linear
# The d_ff dimension is processed in static chunks so the f32 intermediate is
# bounded to (tm, block_ff); partial results accumulate into a (tm, d_model)
# f32 value that is written once, lane-dense, at the end.
# ---------------------------------------------------------------------------
def _make_ffn_kernel(d_ff, block_ff, precision=None):
    n_chunks = d_ff // block_ff          # wrapper guarantees block_ff divides d_ff

    def kernel(x_ref, w1_ref, b1_ref, w2_ref, b2_ref, o_ref):
        x = x_ref[...]                                            # (tm, d_model), native dtype
        acc = jnp.zeros((x_ref.shape[0], o_ref.shape[-1]), jnp.float32)
        for c in range(n_chunks):                                 # static offsets -> cheap slices
            lo = c * block_ff
            # First linear (MXU, f32 accumulation), one d_ff chunk at a time.
            h = jnp.dot(x, w1_ref[:, lo:lo + block_ff],
                        preferred_element_type=jnp.float32, precision=precision)
            h = jnp.maximum(h + b1_ref[:, lo:lo + block_ff], 0.0)  # bias (f32) + ReLU
            # TODO(synk): nn.Dropout omitted -- identity at inference (no training RNG path).
            if w2_ref.dtype != jnp.float32:
                h = h.astype(w2_ref.dtype)                        # bf16 fast path to the MXU
            # Second linear: accumulate the chunk's contribution in f32 on-chip.
            acc = acc + jnp.dot(h, w2_ref[lo:lo + block_ff, :],
                                preferred_element_type=jnp.float32, precision=precision)
        o_ref[...] = (acc + b2_ref[...]).astype(o_ref.dtype)      # lane-dense unmasked store

    return kernel


def positionwise_ffn(x, w1, b1, w2, b2, *, block_m=512, block_ff=1024,
                     mxu_dtype=None, precision=None):
    """Fused FFN: relu(x @ W1 + b1) @ W2 + b2.

    x:  (..., d_model)
    w1: (d_model, d_ff)   b1: (d_ff,)      (PyTorch weight (out, in) stored transposed)
    w2: (d_ff, d_model)   b2: (d_model,)
    mxu_dtype: optionally cast x/W1/W2 to this dtype (e.g. jnp.bfloat16) for the MXU;
               accumulation stays f32 and the output keeps x's original dtype.
    """
    d_model = x.shape[-1]
    d_ff = w1.shape[1]
    assert w1.shape == (d_model, d_ff) and w2.shape == (d_ff, d_model)
    assert b1.shape == (d_ff,) and b2.shape == (d_model,)

    out_dtype = x.dtype
    lead = x.shape[:-1]
    x2 = x.reshape(-1, d_model)                      # lane-dense (M, d_model) slab
    M = x2.shape[0]

    if mxu_dtype is not None:
        x2 = x2.astype(mxu_dtype)
        w1 = w1.astype(mxu_dtype)
        w2 = w2.astype(mxu_dtype)

    # Biases pre-cast to f32 once in the wrapper (kernel does no bias-dtype plumbing).
    b1f = b1.astype(jnp.float32).reshape(1, d_ff)
    b2f = b2.astype(jnp.float32).reshape(1, d_model)

    # --- Row tile: big tiles amortize per-step overhead; for M > 256 guarantee >= 2 grid
    # --- steps (multiple of 128) so the "parallel" axis can shard across 2 TCs on v7x.
    if M <= 256:
        tm = M
    else:
        tm = min(_round_up(block_m, 128), _round_up(pl.cdiv(M, 2), 128))
    grid_m = pl.cdiv(M, tm)

    # --- d_ff chunking bounds the f32 intermediate to (tm, block_ff).
    bff = min(block_ff, d_ff)
    if d_ff % bff != 0:
        bff = d_ff

    kernel = _make_ffn_kernel(d_ff, bff, precision)

    # --- Explicit VMEM budget (weights double-buffered by default, 2x in/out tiles,
    # --- f32 intermediate + its cast copy, f32 accumulator) with headroom.
    itm = jnp.dtype(x2.dtype).itemsize
    ito = jnp.dtype(out_dtype).itemsize
    w_bytes = (d_model * d_ff + d_ff * d_model) * itm
    need = (2 * w_bytes
            + 2 * (d_ff + d_model) * 4            # f32 biases (double-buffered)
            + 2 * tm * d_model * itm              # x tile (double-buffered)
            + 2 * tm * d_model * ito              # out tile (double-buffered)
            + tm * bff * (4 + itm)                # f32 h + cast copy
            + tm * d_model * 4)                   # f32 accumulator
    vmem_limit = int(min(64 << 20, max(int(1.5 * need) + (2 << 20), 16 << 20)))

    out = pl.pallas_call(
        kernel,
        out_shape=jax.ShapeDtypeStruct((M, d_model), out_dtype),
        grid=(grid_m,),
        in_specs=[
            pl.BlockSpec((tm, d_model), lambda i: (i, 0)),     # x tile (pipelined over M)
            pl.BlockSpec((d_model, d_ff), lambda i: (0, 0)),   # W1 (grid-invariant, VMEM-resident)
            pl.BlockSpec((1, d_ff), lambda i: (0, 0)),         # b1 (f32)
            pl.BlockSpec((d_ff, d_model), lambda i: (0, 0)),   # W2 (grid-invariant, VMEM-resident)
            pl.BlockSpec((1, d_model), lambda i: (0, 0)),      # b2 (f32)
        ],
        out_specs=pl.BlockSpec((tm, d_model), lambda i: (i, 0)),
        compiler_params=pltpu.CompilerParams(
            dimension_semantics=("parallel",),                 # shard M across TCs (v7x)
            vmem_limit_bytes=vmem_limit),
    )(x2, w1, b1f, w2, b2f)

    return out.reshape(*lead, d_model)


# ---------------------------------------------------------------------------
# Pure-JAX reference (matches PyTorch forward at eval time)
# ---------------------------------------------------------------------------
def ffn_reference(x, w1, b1, w2, b2):
    h = x.astype(jnp.float32) @ w1.astype(jnp.float32) + b1.astype(jnp.float32)
    h = jnp.maximum(h, 0.0)
    return h @ w2.astype(jnp.float32) + b2.astype(jnp.float32)


if __name__ == "__main__":
    # Small shapes consistent with the module: batch=2, seq=8, d_model=128, d_ff=256.
    batch, seq, d_model, d_ff = 2, 8, 128, 256

    key = jax.random.PRNGKey(0)
    key, kx, kw1, kb1, kw2, kb2 = jax.random.split(key, 6)

    x = jax.random.normal(kx, (batch, seq, d_model), jnp.float32)

    # nn.Linear default init: U(-1/sqrt(fan_in), 1/sqrt(fan_in)); weights stored (in, out).
    bound1 = 1.0 / math.sqrt(d_model)
    w1 = jax.random.uniform(kw1, (d_model, d_ff), jnp.float32, -bound1, bound1)
    b1 = jax.random.uniform(kb1, (d_ff,), jnp.float32, -bound1, bound1)
    bound2 = 1.0 / math.sqrt(d_ff)
    w2 = jax.random.uniform(kw2, (d_ff, d_model), jnp.float32, -bound2, bound2)
    b2 = jax.random.uniform(kb2, (d_model,), jnp.float32, -bound2, bound2)

    y_ref = ffn_reference(x.reshape(-1, d_model), w1, b1, w2, b2).reshape(batch, seq, d_model)

    # 1) f32 path (no operand downcast anywhere).
    y = jax.block_until_ready(positionwise_ffn(x, w1, b1, w2, b2))
    assert y.shape == (batch, seq, d_model)
    assert jnp.allclose(y, y_ref, atol=1e-4, rtol=1e-4), "f32 mismatch vs reference"

    # 2) bf16 fast path: all operands bf16 to the MXU, f32 accumulation, bf16 output.
    xb, w1b, b1b, w2b, b2b = (a.astype(jnp.bfloat16) for a in (x, w1, b1, w2, b2))
    yb = jax.block_until_ready(positionwise_ffn(xb, w1b, b1b, w2b, b2b))
    assert jnp.allclose(yb.astype(jnp.float32), y_ref, atol=7e-2, rtol=7e-2), \
        "bf16 mismatch vs reference"

    # 3) f32 params with mxu_dtype=bf16 (recommended v6e/v7x path) on a larger token count,
    #    exercising the multi-step "parallel" M grid (M=384 -> tm=256, grid=2).
    seq_big = 192
    xg = jax.random.normal(key, (batch, seq_big, d_model), jnp.float32)
    yg = jax.block_until_ready(
        positionwise_ffn(xg, w1, b1, w2, b2, mxu_dtype=jnp.bfloat16))
    yg_ref = ffn_reference(xg.reshape(-1, d_model), w1, b1, w2, b2) \
        .reshape(batch, seq_big, d_model)
    assert yg.shape == (batch, seq_big, d_model)
    assert jnp.allclose(yg, yg_ref, atol=7e-2, rtol=7e-2), "bf16-MXU mismatch vs reference"

    print("KERNEL_OK")
</pallas_src>

<mosaic_0001>
module attributes {stable_mosaic.version = 11 : i64} {
  func.func @kernel(%arg0: i32, %arg1: memref<16x128xf32, #tpu.memory_space<vmem>>, %arg2: memref<128x256xf32, #tpu.memory_space<vmem>>, %arg3: memref<1x256xf32, #tpu.memory_space<vmem>>, %arg4: memref<256x128xf32, #tpu.memory_space<vmem>>, %arg5: memref<1x128xf32, #tpu.memory_space<vmem>>, %arg6: memref<16x128xf32, #tpu.memory_space<vmem>>) attributes {dimension_semantics = [#tpu.dimension_semantics<parallel>], iteration_bounds = array<i64: 1>, scalar_prefetch = 0 : i64, scratch_operands = 0 : i64, tpu.core_type = #tpu.core_type<tc>, window_params = [{transform_indices = @transform_0, window_bounds = array<i64: 16, 128>}, {pipeline_mode = #tpu.pipeline_mode<synchronous>, transform_indices = @transform_1, window_bounds = array<i64: 128, 256>}, {pipeline_mode = #tpu.pipeline_mode<synchronous>, transform_indices = @transform_2, window_bounds = array<i64: 1, 256>}, {pipeline_mode = #tpu.pipeline_mode<synchronous>, transform_indices = @transform_3, window_bounds = array<i64: 256, 128>}, {pipeline_mode = #tpu.pipeline_mode<synchronous>, transform_indices = @transform_4, window_bounds = array<i64: 1, 128>}, {transform_indices = @transform_5, window_bounds = array<i64: 16, 128>}]} {
    %c0 = arith.constant 0 : index
    %c0_0 = arith.constant 0 : index
    %0 = vector.load %arg1[%c0, %c0_0] : memref<16x128xf32, #tpu.memory_space<vmem>>, vector<16x128xf32>
    %cst = arith.constant 0.000000e+00 : f32
    %1 = vector.broadcast %cst : f32 to vector<16x128xf32>
    %c0_1 = arith.constant 0 : index
    %c0_2 = arith.constant 0 : index
    %2 = vector.load %arg2[%c0_1, %c0_2] : memref<128x256xf32, #tpu.memory_space<vmem>>, vector<128x256xf32>
    %cst_3 = arith.constant dense<0.000000e+00> : vector<16x256xf32>
    %3 = tpu.matmul %0, %2, %cst_3 {dimension_numbers = #tpu.dot_dimension_numbers<[1], [0], [0], [1], [0, 0, 1, 1], [], []>} : vector<16x128xf32>, vector<128x256xf32>, vector<16x256xf32> -> vector<16x256xf32>
    %c0_4 = arith.constant 0 : index
    %c0_5 = arith.constant 0 : index
    %4 = vector.load %arg3[%c0_4, %c0_5] : memref<1x256xf32, #tpu.memory_space<vmem>>, vector<1x256xf32>
    %5 = vector.broadcast %4 : vector<1x256xf32> to vector<16x256xf32>
    %6 = arith.addf %3, %5 : vector<16x256xf32>
    %cst_6 = arith.constant 0.000000e+00 : f32
    %7 = vector.broadcast %cst_6 : f32 to vector<16x256xf32>
    %8 = arith.maximumf %6, %7 : vector<16x256xf32>
    %c0_7 = arith.constant 0 : index
    %c0_8 = arith.constant 0 : index
    %9 = vector.load %arg4[%c0_7, %c0_8] : memref<256x128xf32, #tpu.memory_space<vmem>>, vector<256x128xf32>
    %cst_9 = arith.constant dense<0.000000e+00> : vector<16x128xf32>
    %10 = tpu.matmul %8, %9, %cst_9 {dimension_numbers = #tpu.dot_dimension_numbers<[1], [0], [0], [1], [0, 0, 1, 1], [], []>} : vector<16x256xf32>, vector<256x128xf32>, vector<16x128xf32> -> vector<16x128xf32>
    %11 = arith.addf %1, %10 : vector<16x128xf32>
    %c0_10 = arith.constant 0 : index
    %c0_11 = arith.constant 0 : index
    %12 = vector.load %arg5[%c0_10, %c0_11] : memref<1x128xf32, #tpu.memory_space<vmem>>, vector<1x128xf32>
    %13 = vector.broadcast %12 : vector<1x128xf32> to vector<16x128xf32>
    %14 = arith.addf %11, %13 : vector<16x128xf32>
    %c0_12 = arith.constant 0 : index
    %c0_13 = arith.constant 0 : index
    %15 = vector.load %arg6[%c0_12, %c0_13] : memref<16x128xf32, #tpu.memory_space<vmem>>, vector<16x128xf32>
    tpu.vector_store %arg6[%c0_12, %c0_13], %14 {strides = array<i32>} : memref<16x128xf32, #tpu.memory_space<vmem>>, vector<16x128xf32>,
    return
  }
  func.func @transform_0(%arg0: i32) -> (i32, i32) {
    %c0_i32 = arith.constant 0 : i32
    %c0_i32_0 = arith.constant 0 : i32
    return %arg0, %c0_i32 : i32, i32
  }
  func.func @transform_1(%arg0: i32) -> (i32, i32) {
    %c0_i32 = arith.constant 0 : i32
    %c0_i32_0 = arith.constant 0 : i32
    %c0_i32_1 = arith.constant 0 : i32
    return %c0_i32, %c0_i32_0 : i32, i32
  }
  func.func @transform_2(%arg0: i32) -> (i32, i32) {
    %c0_i32 = arith.constant 0 : i32
    %c0_i32_0 = arith.constant 0 : i32
    %c0_i32_1 = arith.constant 0 : i32
    return %c0_i32, %c0_i32_0 : i32, i32
  }
  func.func @transform_3(%arg0: i32) -> (i32, i32) {
    %c0_i32 = arith.constant 0 : i32
    %c0_i32_0 = arith.constant 0 : i32
    %c0_i32_1 = arith.constant 0 : i32
    return %c0_i32, %c0_i32_0 : i32, i32
  }
  func.func @transform_4(%arg0: i32) -> (i32, i32) {
    %c0_i32 = arith.constant 0 : i32
    %c0_i32_0 = arith.constant 0 : i32
    %c0_i32_1 = arith.constant 0 : i32
    return %c0_i32, %c0_i32_0 : i32, i32
  }
  func.func @transform_5(%arg0: i32) -> (i32, i32) {
    %c0_i32 = arith.constant 0 : i32
    %c0_i32_0 = arith.constant 0 : i32
    return %arg0, %c0_i32 : i32, i32
  }
}

</mosaic_0001>

<llo_original>
// kernel: tpu_custom_call.1
$region0: #{tpu_custom_call.1}
  #allocation0 [shape = 'u32[]', space=smem, size = 0x4, offset = 0x4, fixed_abs, tag = 'smem constant byte address 0x4 - core index']
  #allocation1 [shape = 'u32[144,128]{1,0:T(1,128)}', space=vmem, size = 0x12000, scoped, tag = 'internal scratch']
  %s0 = inlined_call_operand.hbm [shape: f32[16,128], index: 0, kind: input, shape index: {}]
  %s1 = inlined_call_operand.hbm [shape: f32[128,256], index: 1, kind: input, shape index: {}]
  %s2 = inlined_call_operand.vmem [shape: f32[1,256], index: 2, kind: input, shape index: {}]
  %s3 = inlined_call_operand.hbm [shape: f32[256,128], index: 3, kind: input, shape index: {}]
  %s4 = inlined_call_operand.vmem [shape: f32[1,128], index: 4, kind: input, shape index: {}]
  %s5 = inlined_call_operand.hbm [shape: f32[16,128], index: 5, kind: output, shape index: {}]
  %s6 = sld [smem:[#allocation0]]
  $region42: #{tpu_custom_call.1} parent=0
    _
  %s8 = ssub.s32 1, %s6
  %s9 = scalar_select 0, %s8, %s6
  $region1: #{tpu_custom_call.1} parent=0
    #allocation2 [shape = 'u8[8192]{0}', space=vmem, size = 0x2000, scoped, tag = 'input window, operand 0, single buffered']
    #allocation3 [shape = 's32[1]{0}', space=sflag, size = 0x4, scoped, tag = 'scoped memory for tpu_custom_call.1']
    #allocation4 [shape = 's32[1]{0}', space=sflag, size = 0x4, scoped, tag = 'scoped memory for tpu_custom_call.1']
    #allocation5 [shape = 'u8[131072]{0}', space=vmem, size = 0x20000, scoped, tag = 'input window, operand 1, single buffered']
    #allocation6 [shape = 's32[1]{0}', space=sflag, size = 0x4, scoped, tag = 'scoped memory for tpu_custom_call.1']
    #allocation7 [shape = 'u8[131072]{0}', space=vmem, size = 0x20000, scoped, tag = 'input window, operand 3, single buffered']
    #allocation8 [shape = 'u8[8192]{0}', space=vmem, size = 0x2000, scoped, tag = 'output window, operand 0, single buffered']
    %10 = vsyncpa [#allocation3], 0
    %11 = vsyncpa [#allocation6], 0
    %12 = vsyncpa [#allocation4], 0
    // Predicated region
    $region2: #{tpu_custom_call.1} parent=1 // pred_check
      _
    $region3: #{tpu_custom_call.1} parent=1 // pred_check_branch
      %14 = sbr.rel (0) target = $region5
    $region4: #{tpu_custom_call.1} parent=1 // pred_region
      %s16 = ssub.s32 256, 256
      %17 = vsyncadd [#allocation3], %s16
      %s18 = sshll.u32 [#allocation2], 4
      %s19 = int_to_ptr.vmem [resolvable:$true] %s18
      %24 = dma.hbm_to_vmem [thread:$0]  %s0, 256, %s19, [#allocation3], 128, 128, 8
    $region5: #{tpu_custom_call.1} parent=1 // pred_fallthru
      _
    // Predicated region
    $region6: #{tpu_custom_call.1} parent=1 // pred_check
      _
    $region7: #{tpu_custom_call.1} parent=1 // pred_check_branch
      %26 = sbr.rel (0) target = $region9
    $region8: #{tpu_custom_call.1} parent=1 // pred_region
      %s28 = ssub.s32 4096, 4096
      %29 = vsyncadd [#allocation6], %s28
      %s30 = sshll.u32 [#allocation5], 4
      %s31 = int_to_ptr.vmem [resolvable:$true] %s30
      %36 = dma.hbm_to_vmem [thread:$0]  %s1, 4096, %s31, [#allocation6], 256, 256, 16
    $region9: #{tpu_custom_call.1} parent=1 // pred_fallthru
      _
    // Predicated region
    $region10: #{tpu_custom_call.1} parent=1 // pred_check
      _
    $region11: #{tpu_custom_call.1} parent=1 // pred_check_branch
      %38 = sbr.rel (0) target = $region13
    $region12: #{tpu_custom_call.1} parent=1 // pred_region
      _
    $region13: #{tpu_custom_call.1} parent=1 // pred_fallthru
      _
    // Predicated region
    $region14: #{tpu_custom_call.1} parent=1 // pred_check
      _
    $region15: #{tpu_custom_call.1} parent=1 // pred_check_branch
      %40 = sbr.rel (0) target = $region17
    $region16: #{tpu_custom_call.1} parent=1 // pred_region
      %s42 = ssub.s32 4096, 4096
      %43 = vsyncadd [#allocation6], %s42
      %s44 = sshll.u32 [#allocation7], 4
      %s45 = int_to_ptr.vmem [resolvable:$true] %s44
      %50 = dma.hbm_to_vmem [thread:$0]  %s3, 4096, %s45, [#allocation6], 128, 128, 8
    $region17: #{tpu_custom_call.1} parent=1 // pred_fallthru
      _
    // Predicated region
    $region18: #{tpu_custom_call.1} parent=1 // pred_check
      _
    $region19: #{tpu_custom_call.1} parent=1 // pred_check_branch
      %52 = sbr.rel (0) target = $region21
    $region20: #{tpu_custom_call.1} parent=1 // pred_region
      _
    $region21: #{tpu_custom_call.1} parent=1 // pred_fallthru
      _
    // Predicated region
    $region22: #{tpu_custom_call.1} parent=1 // pred_check
      _
    $region23: #{tpu_custom_call.1} parent=1 // pred_check_branch
      %54 = sbr.rel (0) target = $region25
    $region24: #{tpu_custom_call.1} parent=1 // pred_region
      %55 = dma.done [#allocation3], 256
    $region25: #{tpu_custom_call.1} parent=1 // pred_fallthru
      _
    // Predicated region
    $region26: #{tpu_custom_call.1} parent=1 // pred_check
      _
    $region27: #{tpu_custom_call.1} parent=1 // pred_check_branch
      %57 = sbr.rel (0) target = $region29
    $region28: #{tpu_custom_call.1} parent=1 // pred_region
      %58 = dma.done [#allocation6], 4096
    $region29: #{tpu_custom_call.1} parent=1 // pred_fallthru
      _
    // Predicated region
    $region30: #{tpu_custom_call.1} parent=1 // pred_check
      _
    $region31: #{tpu_custom_call.1} parent=1 // pred_check_branch
      %60 = sbr.rel (0) target = $region33
    $region32: #{tpu_custom_call.1} parent=1 // pred_region
      %61 = dma.done [#allocation6], 4096
    $region33: #{tpu_custom_call.1} parent=1 // pred_fallthru
      _
    %v62 = vld [vmem:[#allocation2] sm:$0xff]
    %v63 = vld [vmem:[#allocation2 + $0x8] sm:$0xff]
    %v64 = vld [vmem:[#allocation5] sm:$0xff]
    %v65 = vld [vmem:[#allocation5 + $0x8] sm:$0xff]
    %v66 = vld [vmem:[#allocation5 + $0x10] sm:$0xff]
    %v67 = vld [vmem:[#allocation5 + $0x18] sm:$0xff]
    %v68 = vld [vmem:[#allocation5 + $0x20] sm:$0xff]
    %v69 = vld [vmem:[#allocation5 + $0x28] sm:$0xff]
    %v70 = vld [vmem:[#allocation5 + $0x30] sm:$0xff]
    %v71 = vld [vmem:[#allocation5 + $0x38] sm:$0xff]
    %v72 = vld [vmem:[#allocation5 + $0x40] sm:$0xff]
    %v73 = vld [vmem:[#allocation5 + $0x48] sm:$0xff]
    %v74 = vld [vmem:[#allocation5 + $0x50] sm:$0xff]
    %v75 = vld [vmem:[#allocation5 + $0x58] sm:$0xff]
    %v76 = vld [vmem:[#allocation5 + $0x60] sm:$0xff]
    %v77 = vld [vmem:[#allocation5 + $0x68] sm:$0xff]
    %v78 = vld [vmem:[#allocation5 + $0x70] sm:$0xff]
    %v79 = vld [vmem:[#allocation5 + $0x78] sm:$0xff]
    %v80 = vld [vmem:[#allocation5 + $0x80] sm:$0xff]
    %v81 = vld [vmem:[#allocation5 + $0x88] sm:$0xff]
    %v82 = vld [vmem:[#allocation5 + $0x90] sm:$0xff]
    %v83 = vld [vmem:[#allocation5 + $0x98] sm:$0xff]
    %v84 = vld [vmem:[#allocation5 + $0xa0] sm:$0xff]
    %v85 = vld [vmem:[#allocation5 + $0xa8] sm:$0xff]
    %v86 = vld [vmem:[#allocation5 + $0xb0] sm:$0xff]
    %v87 = vld [vmem:[#allocation5 + $0xb8] sm:$0xff]
    %v88 = vld [vmem:[#allocation5 + $0xc0] sm:$0xff]
    %v89 = vld [vmem:[#allocation5 + $0xc8] sm:$0xff]
    %v90 = vld [vmem:[#allocation5 + $0xd0] sm:$0xff]
    %v91 = vld [vmem:[#allocation5 + $0xd8] sm:$0xff]
    %v92 = vld [vmem:[#allocation5 + $0xe0] sm:$0xff]
    %v93 = vld [vmem:[#allocation5 + $0xe8] sm:$0xff]
    %v94 = vld [vmem:[#allocation5 + $0xf0] sm:$0xff]
    %v95 = vld [vmem:[#allocation5 + $0xf8] sm:$0xff]
    %v96 = vld [vmem:[%s2] sm:$0x3]
    %v98 = vlaneseq
    %v99 = vshrl.u32 %v98, 7
    %v100 = vsub.s32 0, %v99
    %v101 = vrot.slane %v96, %v100
    %v102 = vlaneseq
    %v103 = vshrl.u32 %v102, 7
    %v104 = vsub.s32 1, %v103
    %v105 = vrot.slane %v96, %v104
    %108 = vmatprep.subr.mxu0 %v65
    %109 = vmatpush1.msra.mxu0 %v64
    %110 = vmatprep.subr.mxu0 %v67
    %111 = vmatpush1.msra.mxu0 %v66
    %112 = vmatprep.subr.mxu0 %v69
    %113 = vmatpush1.msra.mxu0 %v68
    %114 = vmatprep.subr.mxu0 %v71
    %115 = vmatpush1.msra.mxu0 %v70
    %116 = vmatprep.subr.mxu0 %v73
    %117 = vmatpush1.msra.mxu0 %v72
    %118 = vmatprep.subr.mxu0 %v75
    %119 = vmatpush1.msra.mxu0 %v74
    %120 = vmatprep.subr.mxu0 %v77
    %121 = vmatpush1.msra.mxu0 %v76
    %122 = vmatprep.subr.mxu0 %v79
    %123 = vmatpush1.msra.mxu0 %v78
    %124 = vmatprep.subr.mxu0 %v81
    %125 = vmatpush1.msra.mxu0 %v80
    %126 = vmatprep.subr.mxu0 %v83
    %127 = vmatpush1.msra.mxu0 %v82
    %128 = vmatprep.subr.mxu0 %v85
    %129 = vmatpush1.msra.mxu0 %v84
    %130 = vmatprep.subr.mxu0 %v87
    %131 = vmatpush1.msra.mxu0 %v86
    %132 = vmatprep.subr.mxu0 %v89
    %133 = vmatpush1.msra.mxu0 %v88
    %134 = vmatprep.subr.mxu0 %v91
    %135 = vmatpush1.msra.mxu0 %v90
    %136 = vmatprep.subr.mxu0 %v93
    %137 = vmatpush1.msra.mxu0 %v92
    %138 = vmatprep.subr.mxu0 %v95
    %139 = vmatpush1.msra.mxu0 %v94
    %140 = vmatprep.subr.mxu0 0.0
    %141 = vmatpush1.msra.mxu0 0.0
    %142 = vmatprep.subr.mxu0 0.0
    %143 = vmatpush1.msra.mxu0 0.0
    %144 = vmatprep.subr.mxu0 0.0
    %145 = vmatpush1.msra.mxu0 0.0
    %146 = vmatprep.subr.mxu0 0.0
    %147 = vmatpush1.msra.mxu0 0.0
    %148 = vmatprep.subr.mxu0 0.0
    %149 = vmatpush1.msra.mxu0 0.0
    %150 = vmatprep.subr.mxu0 0.0
    %151 = vmatpush1.msra.mxu0 0.0
    %152 = vmatprep.subr.mxu0 0.0
    %153 = vmatpush1.msra.mxu0 0.0
    %154 = vmatprep.subr.mxu0 0.0
    %155 = vmatpush1.msra.mxu0 0.0
    %156 = vmatprep.subr.mxu0 0.0
    %157 = vmatpush1.msra.mxu0 0.0
    %158 = vmatprep.subr.mxu0 0.0
    %159 = vmatpush1.msra.mxu0 0.0
    %160 = vmatprep.subr.mxu0 0.0
    %161 = vmatpush1.msra.mxu0 0.0
    %162 = vmatprep.subr.mxu0 0.0
    %163 = vmatpush1.msra.mxu0 0.0
    %164 = vmatprep.subr.mxu0 0.0
    %165 = vmatpush1.msra.mxu0 0.0
    %166 = vmatprep.subr.mxu0 0.0
    %167 = vmatpush1.msra.mxu0 0.0
    %168 = vmatprep.subr.mxu0 0.0
    %169 = vmatpush1.msra.mxu0 0.0
    %170 = vmatprep.subr.mxu0 0.0
    %171 = vmatpush1.msra.mxu0 0.0
    %172 = vmatprep.mubr.f32.mxu0 0.0
    %173 = vmatmul.mubr.f32.gmra.mrb[0].mxu0 %v62
    %v174 = vpop.f32.mrb[0].mxu0
    %v175 = vadd.f32 %v101, %v174
    %v176 = vpop.f32.mrb[0].mxu0
    %v177 = vadd.f32 %v105, %v176
    %178 = vmatprep.mubr.f32.mxu0 0.0
    %179 = vmatmul.mubr.f32.gmra.mrb[0].mxu0 %v63
    %v180 = vpop.f32.mrb[0].mxu0
    %v181 = vadd.f32 %v101, %v180
    %v182 = vpop.f32.mrb[0].mxu0
    %v183 = vadd.f32 %v105, %v182
    %184 = vdwg.mxu0
    %v185 = vmax.f32 %v175, 0.0
    %v186 = vmax.f32 %v177, 0.0
    %v187 = vmax.f32 %v181, 0.0
    %v188 = vmax.f32 %v183, 0.0
    %v189 = vld [vmem:[#allocation7] sm:$0xff]
    %v190 = vld [vmem:[#allocation7 + $0x8] sm:$0xff]
    %v191 = vld [vmem:[#allocation7 + $0x10] sm:$0xff]
    %v192 = vld [vmem:[#allocation7 + $0x18] sm:$0xff]
    %v193 = vld [vmem:[#allocation7 + $0x20] sm:$0xff]
    %v194 = vld [vmem:[#allocation7 + $0x28] sm:$0xff]
    %v195 = vld [vmem:[#allocation7 + $0x30] sm:$0xff]
    %v196 = vld [vmem:[#allocation7 + $0x38] sm:$0xff]
    %v197 = vld [vmem:[#allocation7 + $0x40] sm:$0xff]
    %v198 = vld [vmem:[#allocation7 + $0x48] sm:$0xff]
    %v199 = vld [vmem:[#allocation7 + $0x50] sm:$0xff]
    %v200 = vld [vmem:[#allocation7 + $0x58] sm:$0xff]
    %v201 = vld [vmem:[#allocation7 + $0x60] sm:$0xff]
    %v202 = vld [vmem:[#allocation7 + $0x68] sm:$0xff]
    %v203 = vld [vmem:[#allocation7 + $0x70] sm:$0xff]
    %v204 = vld [vmem:[#allocation7 + $0x78] sm:$0xff]
    %v205 = vld [vmem:[#allocation7 + $0x80] sm:$0xff]
    %v206 = vld [vmem:[#allocation7 + $0x88] sm:$0xff]
    %v207 = vld [vmem:[#allocation7 + $0x90] sm:$0xff]
    %v208 = vld [vmem:[#allocation7 + $0x98] sm:$0xff]
    %v209 = vld [vmem:[#allocation7 + $0xa0] sm:$0xff]
    %v210 = vld [vmem:[#allocation7 + $0xa8] sm:$0xff]
    %v211 = vld [vmem:[#allocation7 + $0xb0] sm:$0xff]
    %v212 = vld [vmem:[#allocation7 + $0xb8] sm:$0xff]
    %v213 = vld [vmem:[#allocation7 + $0xc0] sm:$0xff]
    %v214 = vld [vmem:[#allocation7 + $0xc8] sm:$0xff]
    %v215 = vld [vmem:[#allocation7 + $0xd0] sm:$0xff]
    %v216 = vld [vmem:[#allocation7 + $0xd8] sm:$0xff]
    %v217 = vld [vmem:[#allocation7 + $0xe0] sm:$0xff]
    %v218 = vld [vmem:[#allocation7 + $0xe8] sm:$0xff]
    %v219 = vld [vmem:[#allocation7 + $0xf0] sm:$0xff]
    %v220 = vld [vmem:[#allocation7 + $0xf8] sm:$0xff]
    %v221 = vld [vmem:[%s4] sm:$0x1]
    %v223 = vlaneseq
    %v224 = vshrl.u32 %v223, 7
    %v225 = vsub.s32 0, %v224
    %v226 = vrot.slane %v221, %v225
    %228 = vmatprep.subr.mxu0 0.0
    %229 = vmatpush1.msra.mxu0 %v189
    %230 = vmatprep.subr.mxu0 0.0
    %231 = vmatpush1.msra.mxu0 %v190
    %232 = vmatprep.subr.mxu0 0.0
    %233 = vmatpush1.msra.mxu0 %v191
    %234 = vmatprep.subr.mxu0 0.0
    %235 = vmatpush1.msra.mxu0 %v192
    %236 = vmatprep.subr.mxu0 0.0
    %237 = vmatpush1.msra.mxu0 %v193
    %238 = vmatprep.subr.mxu0 0.0
    %239 = vmatpush1.msra.mxu0 %v194
    %240 = vmatprep.subr.mxu0 0.0
    %241 = vmatpush1.msra.mxu0 %v195
    %242 = vmatprep.subr.mxu0 0.0
    %243 = vmatpush1.msra.mxu0 %v196
    %244 = vmatprep.subr.mxu0 0.0
    %245 = vmatpush1.msra.mxu0 %v197
    %246 = vmatprep.subr.mxu0 0.0
    %247 = vmatpush1.msra.mxu0 %v198
    %248 = vmatprep.subr.mxu0 0.0
    %249 = vmatpush1.msra.mxu0 %v199
    %250 = vmatprep.subr.mxu0 0.0
    %251 = vmatpush1.msra.mxu0 %v200
    %252 = vmatprep.subr.mxu0 0.0
    %253 = vmatpush1.msra.mxu0 %v201
    %254 = vmatprep.subr.mxu0 0.0
    %255 = vmatpush1.msra.mxu0 %v202
    %256 = vmatprep.subr.mxu0 0.0
    %257 = vmatpush1.msra.mxu0 %v203
    %258 = vmatprep.subr.mxu0 0.0
    %259 = vmatpush1.msra.mxu0 %v204
    %260 = vmatprep.subr.mxu0 0.0
    %261 = vmatpush1.msra.mxu0 %v205
    %262 = vmatprep.subr.mxu0 0.0
    %263 = vmatpush1.msra.mxu0 %v206
    %264 = vmatprep.subr.mxu0 0.0
    %265 = vmatpush1.msra.mxu0 %v207
    %266 = vmatprep.subr.mxu0 0.0
    %267 = vmatpush1.msra.mxu0 %v208
    %268 = vmatprep.subr.mxu0 0.0
    %269 = vmatpush1.msra.mxu0 %v209
    %270 = vmatprep.subr.mxu0 0.0
    %271 = vmatpush1.msra.mxu0 %v210
    %272 = vmatprep.subr.mxu0 0.0
    %273 = vmatpush1.msra.mxu0 %v211
    %274 = vmatprep.subr.mxu0 0.0
    %275 = vmatpush1.msra.mxu0 %v212
    %276 = vmatprep.subr.mxu0 0.0
    %277 = vmatpush1.msra.mxu0 %v213
    %278 = vmatprep.subr.mxu0 0.0
    %279 = vmatpush1.msra.mxu0 %v214
    %280 = vmatprep.subr.mxu0 0.0
    %281 = vmatpush1.msra.mxu0 %v215
    %282 = vmatprep.subr.mxu0 0.0
    %283 = vmatpush1.msra.mxu0 %v216
    %284 = vmatprep.subr.mxu0 0.0
    %285 = vmatpush1.msra.mxu0 %v217
    %286 = vmatprep.subr.mxu0 0.0
    %287 = vmatpush1.msra.mxu0 %v218
    %288 = vmatprep.subr.mxu0 0.0
    %289 = vmatpush1.msra.mxu0 %v219
    %290 = vmatprep.subr.mxu0 0.0
    %291 = vmatpush1.msra.mxu0 %v220
    %292 = vmatprep.mubr.f32.mxu0 %v186
    %293 = vmatmul.mubr.f32.gmra.mrb[0].mxu0 %v185
    %v294 = vpop.f32.mrb[0].mxu0
    %v295 = vadd.f32 %v226, %v294
    %v296 = vpop.f32.mrb[0].mxu0
    %297 = vmatprep.mubr.f32.mxu0 %v188
    %298 = vmatmul.mubr.f32.gmra.mrb[0].mxu0 %v187
    %v299 = vpop.f32.mrb[0].mxu0
    %v300 = vadd.f32 %v226, %v299
    %v301 = vpop.f32.mrb[0].mxu0
    %302 = vdwg.mxu0
    %303 = vst [vmem:[#allocation8] sm:$0xff] %v295
    %304 = vst [vmem:[#allocation8 + $0x8] sm:$0xff] %v300
    // Predicated region
    $region34: #{tpu_custom_call.1} parent=1 // pred_check
      _
    $region35: #{tpu_custom_call.1} parent=1 // pred_check_branch
      %306 = sbr.rel (0) target = $region37
    $region36: #{tpu_custom_call.1} parent=1 // pred_region
      %s308 = ssub.s32 256, 256
      %309 = vsyncadd [#allocation4], %s308
      %s310 = sshll.u32 [#allocation8], 4
      %s311 = int_to_ptr.vmem [resolvable:$true] %s310
      %316 = dma.vmem_to_hbm [thread:$0]  %s311, 256, %s5, [#allocation4], 128, 128, 8
    $region37: #{tpu_custom_call.1} parent=1 // pred_fallthru
      _
    // Predicated region
    $region38: #{tpu_custom_call.1} parent=1 // pred_check
      _
    $region39: #{tpu_custom_call.1} parent=1 // pred_check_branch
      %318 = sbr.rel (0) target = $region41
    $region40: #{tpu_custom_call.1} parent=1 // pred_region
      %319 = dma.done [#allocation4], 256
    $region41: #{tpu_custom_call.1} parent=1 // pred_fallthru
      _
    %320 = vsyncpa [#allocation3], 1
    %321 = vsyncpa [#allocation6], 1
    %322 = vsyncpa [#allocation4], 1

</llo_original>
